<compile_context>
chip_gen: v6e
topology: v6e:2x2x1
jax: 0.10.0
libtpu: 0.0.40
codegen_flags: <defaults>
</compile_context>

<pallas_src>
import functools

import jax
import jax.numpy as jnp
from jax import lax
from jax.experimental import pallas as pl
from jax.experimental.pallas import tpu as pltpu


def _round_up(x, m):
    return (x + m - 1) // m * m


def _head_transform_kernel(x_ref, w_ref, b_ref, g_ref, beta_ref, o_ref, *,
                           eps, inv_h, hidden, needs_mask, matmul_dtype):
    # x_ref:    (TM, Kp)   tile of tokens (Kp = padded 2H)
    # w_ref:    (Kp, Hp)   full dense weight, pre-transposed (Hp = padded H)
    # b_ref:    (1, Hp)    dense bias
    # g_ref:    (1, Hp)    LayerNorm gamma
    # beta_ref: (1, Hp)    LayerNorm beta
    # o_ref:    (TM, Hp)   output tile
    xv = x_ref[...]
    wv = w_ref[...]
    if matmul_dtype is not None:
        xv = xv.astype(matmul_dtype)
        wv = wv.astype(matmul_dtype)

    # Dense on the MXU with f32 accumulation.
    h = jnp.dot(xv, wv, preferred_element_type=jnp.float32)
    h = h + b_ref[...].astype(jnp.float32)

    # Exact (erf) GELU — matches torch.nn.functional.gelu / HF "gelu".
    h = 0.5 * h * (1.0 + lax.erf(h * 0.7071067811865476))

    # LayerNorm over the real H features.  Padded lanes are explicitly masked so the
    # statistics never depend on what happens to live in the padding.
    if needs_mask:
        col = lax.broadcasted_iota(jnp.int32, h.shape, 1)
        lane_valid = col < hidden
        h = jnp.where(lane_valid, h, 0.0)

    mean = jnp.sum(h, axis=-1, keepdims=True) * inv_h
    centered = h - mean
    if needs_mask:
        centered = jnp.where(lane_valid, centered, 0.0)
    var = jnp.sum(centered * centered, axis=-1, keepdims=True) * inv_h
    normed = centered * lax.rsqrt(var + eps)
    out = normed * g_ref[...].astype(jnp.float32) + beta_ref[...].astype(jnp.float32)

    o_ref[...] = out.astype(o_ref.dtype)


def prepare_head_transform_params(w, b, gamma, beta):
    """Pad the grid-invariant parameters ONCE (amortized across all forward calls).

    w: (2H, H) pre-transposed dense weight; b/gamma/beta: (H,).
    Real BERT shapes (2H, H multiples of 128) pass through without copies.
    """
    two_h, hidden = w.shape
    kp = max(_round_up(two_h, 128), 128)
    hp = max(_round_up(hidden, 128), 128)

    if (kp, hp) != (two_h, hidden):
        w_p = jnp.zeros((kp, hp), dtype=w.dtype).at[:two_h, :hidden].set(w)
    else:
        w_p = w

    def _vec(v):
        if hp != hidden:
            v = jnp.zeros((hp,), dtype=v.dtype).at[:hidden].set(v)
        return v.reshape(1, hp)

    return {
        "w": w_p, "b": _vec(b), "gamma": _vec(gamma), "beta": _vec(beta),
        "two_h": two_h, "hidden": hidden, "kp": kp, "hp": hp,
    }


def bert_prediction_head_transform(x, params, *, eps=1e-12, row_tile=None,
                                   matmul_dtype=None):
    """x: (..., 2H) -> (..., H) using params from prepare_head_transform_params()."""
    two_h, hidden = params["two_h"], params["hidden"]
    kp, hp = params["kp"], params["hp"]
    assert x.shape[-1] == two_h

    orig_shape = x.shape
    x2d = x.reshape(-1, two_h)
    n = x2d.shape[0]

    # Only pad the contraction dim when it is genuinely misaligned (never pad rows).
    if kp != two_h:
        x2d = jnp.pad(x2d, ((0, 0), (0, kp - two_h)))

    # Per-generation VMEM budget (v5e/v6e: 128 MiB, v7x: 64 MiB per TensorCore).
    try:
        vmem_cap = int(getattr(pltpu.get_tpu_info(), "vmem_capacity_bytes", 64 << 20))
    except Exception:  # conservative fallback, safe on every generation
        vmem_cap = 64 << 20
    vmem_budget = vmem_cap - (8 << 20)

    x_item = jnp.dtype(x.dtype).itemsize
    w_item = jnp.dtype(params["w"].dtype).itemsize

    def _vmem_estimate(rt):
        return (2 * rt * kp * x_item          # double-buffered x tiles
                + 2 * rt * hp * x_item        # double-buffered output tiles
                + 2 * kp * hp * w_item        # weight (upper bound if double-buffered)
                + 6 * hp * 4                  # bias / gamma / beta
                + 3 * rt * hp * 4             # f32 intermediates (h / centered / out)
                + (2 << 20))                  # misc headroom

    if row_tile is None:
        row_tile = 512 if vmem_cap >= (96 << 20) else 256   # v5e/v6e vs v7x
        while row_tile > 64 and _vmem_estimate(row_tile) > vmem_budget:
            row_tile //= 2
    row_tile = max(8, min(int(row_tile), _round_up(max(n, 1), 8)))

    grid = (pl.cdiv(n, row_tile),)
    vmem_limit = int(min(max(_vmem_estimate(row_tile), 32 << 20), vmem_budget))

    kernel = functools.partial(
        _head_transform_kernel,
        eps=float(eps), inv_h=1.0 / float(hidden), hidden=hidden,
        needs_mask=(hp != hidden), matmul_dtype=matmul_dtype)

    cost = pl.CostEstimate(
        flops=2 * n * kp * hp,
        transcendentals=n * hp + n,   # erf per element + rsqrt per row
        bytes_accessed=n * kp * x_item + kp * hp * w_item + n * hp * x_item + 3 * hp * 4,
    )

    def _run(param_mode):
        def p_spec(shape):
            if param_mode is None:
                return pl.BlockSpec(shape, lambda i: (0, 0))
            return pl.BlockSpec(shape, lambda i: (0, 0), pipeline_mode=param_mode)

        return pl.pallas_call(
            kernel,
            out_shape=jax.ShapeDtypeStruct((n, hp), x.dtype),
            grid_spec=pltpu.PrefetchScalarGridSpec(
                num_scalar_prefetch=0,
                grid=grid,
                in_specs=[
                    pl.BlockSpec((row_tile, kp), lambda i: (i, 0)),  # x tile
                    p_spec((kp, hp)),                                # weight (invariant)
                    p_spec((1, hp)),                                 # dense bias
                    p_spec((1, hp)),                                 # LN gamma
                    p_spec((1, hp)),                                 # LN beta
                ],
                out_specs=pl.BlockSpec((row_tile, hp), lambda i: (i, 0)),
            ),
            compiler_params=pltpu.CompilerParams(
                dimension_semantics=("parallel",),   # shards row tiles across TCs (v7x)
                vmem_limit_bytes=vmem_limit,
            ),
            cost_estimate=cost,
        )(x2d, params["w"], params["b"], params["gamma"], params["beta"])

    try:
        # Grid-invariant operands single-buffered: halves resident weight VMEM.
        out2d = _run(pl.Buffered(1))
    except Exception:
        out2d = _run(None)   # fall back to default pipelining if Buffered(1) is rejected

    if hp != hidden:
        out2d = out2d[:, :hidden]
    return out2d.reshape(*orig_shape[:-1], hidden)


if __name__ == "__main__":
    # Small synthetic config: clip_hidden_size = 32, so dense maps 64 -> 32.
    batch, seq, clip_hidden = 2, 8, 32
    in_features = clip_hidden * 2
    eps = 1e-12

    key = jax.random.PRNGKey(0)
    k_x, k_w, k_b = jax.random.split(key, 3)

    x = jax.random.normal(k_x, (batch, seq, in_features), dtype=jnp.float32)
    # Deterministic synthetic parameters (not a checkpoint load).
    w = jax.random.normal(k_w, (in_features, clip_hidden), dtype=jnp.float32) * 0.02
    b = jax.random.normal(k_b, (clip_hidden,), dtype=jnp.float32) * 0.02
    gamma = jnp.ones((clip_hidden,), dtype=jnp.float32)
    beta = jnp.zeros((clip_hidden,), dtype=jnp.float32)

    params = prepare_head_transform_params(w, b, gamma, beta)   # padded once, reused
    out = bert_prediction_head_transform(x, params, eps=eps)
    out = jax.block_until_ready(out)

    # Reference check in plain JAX (same math path as the PyTorch module).
    h_ref = x @ w + b
    h_ref = 0.5 * h_ref * (1.0 + lax.erf(h_ref / jnp.sqrt(2.0)))
    mu = jnp.mean(h_ref, axis=-1, keepdims=True)
    var = jnp.mean((h_ref - mu) ** 2, axis=-1, keepdims=True)
    ref = (h_ref - mu) / jnp.sqrt(var + eps) * gamma + beta

    assert out.shape == (batch, seq, clip_hidden)
    assert jnp.max(jnp.abs(out - ref)) < 1e-4

    print("KERNEL_OK")
</pallas_src>

<mosaic_0001>
module attributes {stable_mosaic.version = 11 : i64} {
  func.func @_head_transform_kernel(%arg0: i32, %arg1: memref<16x128xf32, #tpu.memory_space<vmem>>, %arg2: memref<128x128xf32, #tpu.memory_space<vmem>>, %arg3: memref<1x128xf32, #tpu.memory_space<vmem>>, %arg4: memref<1x128xf32, #tpu.memory_space<vmem>>, %arg5: memref<1x128xf32, #tpu.memory_space<vmem>>, %arg6: memref<16x128xf32, #tpu.memory_space<vmem>>) attributes {dimension_semantics = [#tpu.dimension_semantics<parallel>], iteration_bounds = array<i64: 1>, scalar_prefetch = 0 : i64, scratch_operands = 0 : i64, tpu.core_type = #tpu.core_type<tc>, window_params = [{transform_indices = @transform_0, window_bounds = array<i64: 16, 128>}, {pipeline_mode = #tpu.pipeline_mode<synchronous>, transform_indices = @transform_1, window_bounds = array<i64: 128, 128>}, {pipeline_mode = #tpu.pipeline_mode<synchronous>, transform_indices = @transform_2, window_bounds = array<i64: 1, 128>}, {pipeline_mode = #tpu.pipeline_mode<synchronous>, transform_indices = @transform_3, window_bounds = array<i64: 1, 128>}, {pipeline_mode = #tpu.pipeline_mode<synchronous>, transform_indices = @transform_4, window_bounds = array<i64: 1, 128>}, {transform_indices = @transform_5, window_bounds = array<i64: 16, 128>}]} {
    %c0 = arith.constant 0 : index
    %c0_0 = arith.constant 0 : index
    %0 = vector.load %arg1[%c0, %c0_0] : memref<16x128xf32, #tpu.memory_space<vmem>>, vector<16x128xf32>
    %c0_1 = arith.constant 0 : index
    %c0_2 = arith.constant 0 : index
    %1 = vector.load %arg2[%c0_1, %c0_2] : memref<128x128xf32, #tpu.memory_space<vmem>>, vector<128x128xf32>
    %cst = arith.constant dense<0.000000e+00> : vector<16x128xf32>
    %2 = tpu.matmul %0, %1, %cst {dimension_numbers = #tpu.dot_dimension_numbers<[1], [0], [0], [1], [0, 0, 1, 1], [], []>} : vector<16x128xf32>, vector<128x128xf32>, vector<16x128xf32> -> vector<16x128xf32>
    %c0_3 = arith.constant 0 : index
    %c0_4 = arith.constant 0 : index
    %3 = vector.load %arg3[%c0_3, %c0_4] : memref<1x128xf32, #tpu.memory_space<vmem>>, vector<1x128xf32>
    %4 = vector.broadcast %3 : vector<1x128xf32> to vector<16x128xf32>
    %5 = arith.addf %2, %4 : vector<16x128xf32>
    %cst_5 = arith.constant 5.000000e-01 : f32
    %6 = vector.broadcast %cst_5 : f32 to vector<16x128xf32>
    %7 = arith.mulf %6, %5 : vector<16x128xf32>
    %cst_6 = arith.constant 0.707106769 : f32
    %8 = vector.broadcast %cst_6 : f32 to vector<16x128xf32>
    %9 = arith.mulf %5, %8 : vector<16x128xf32>
    %10 = math.erf %9 : vector<16x128xf32>
    %cst_7 = arith.constant 1.000000e+00 : f32
    %11 = vector.broadcast %cst_7 : f32 to vector<16x128xf32>
    %12 = arith.addf %11, %10 : vector<16x128xf32>
    %13 = arith.mulf %7, %12 : vector<16x128xf32>
    %14 = tpu.iota {dimensions = array<i32: 1>} : vector<16x128xi32>
    %c32_i32 = arith.constant 32 : i32
    %15 = vector.broadcast %c32_i32 : i32 to vector<16x128xi32>
    %16 = arith.cmpi slt, %14, %15 : vector<16x128xi32>
    %cst_8 = arith.constant 0.000000e+00 : f32
    %17 = vector.broadcast %cst_8 : f32 to vector<16x128xf32>
    %18 = arith.select %16, %13, %17 : vector<16x128xi1>, vector<16x128xf32>
    %cst_9 = arith.constant dense<0.000000e+00> : vector<16xf32>
    %19 = vector.multi_reduction <add>, %18, %cst_9 [1] : vector<16x128xf32> to vector<16xf32>
    %20 = vector.shape_cast %19 : vector<16xf32> to vector<16x1xf32>
    %cst_10 = arith.constant 3.125000e-02 : f32
    %21 = vector.broadcast %cst_10 : f32 to vector<16x1xf32>
    %22 = arith.mulf %20, %21 : vector<16x1xf32>
    %23 = vector.broadcast %22 : vector<16x1xf32> to vector<16x128xf32>
    %24 = arith.subf %18, %23 : vector<16x128xf32>
    %cst_11 = arith.constant 0.000000e+00 : f32
    %25 = vector.broadcast %cst_11 : f32 to vector<16x128xf32>
    %26 = arith.select %16, %24, %25 : vector<16x128xi1>, vector<16x128xf32>
    %27 = arith.mulf %26, %26 : vector<16x128xf32>
    %cst_12 = arith.constant dense<0.000000e+00> : vector<16xf32>
    %28 = vector.multi_reduction <add>, %27, %cst_12 [1] : vector<16x128xf32> to vector<16xf32>
    %29 = vector.shape_cast %28 : vector<16xf32> to vector<16x1xf32>
    %cst_13 = arith.constant 3.125000e-02 : f32
    %30 = vector.broadcast %cst_13 : f32 to vector<16x1xf32>
    %31 = arith.mulf %29, %30 : vector<16x1xf32>
    %cst_14 = arith.constant 9.99999996E-13 : f32
    %32 = vector.broadcast %cst_14 : f32 to vector<16x1xf32>
    %33 = arith.addf %31, %32 : vector<16x1xf32>
    %34 = math.rsqrt %33 : vector<16x1xf32>
    %35 = vector.broadcast %34 : vector<16x1xf32> to vector<16x128xf32>
    %36 = arith.mulf %26, %35 : vector<16x128xf32>
    %c0_15 = arith.constant 0 : index
    %c0_16 = arith.constant 0 : index
    %37 = vector.load %arg4[%c0_15, %c0_16] : memref<1x128xf32, #tpu.memory_space<vmem>>, vector<1x128xf32>
    %38 = vector.broadcast %37 : vector<1x128xf32> to vector<16x128xf32>
    %39 = arith.mulf %36, %38 : vector<16x128xf32>
    %c0_17 = arith.constant 0 : index
    %c0_18 = arith.constant 0 : index
    %40 = vector.load %arg5[%c0_17, %c0_18] : memref<1x128xf32, #tpu.memory_space<vmem>>, vector<1x128xf32>
    %41 = vector.broadcast %40 : vector<1x128xf32> to vector<16x128xf32>
    %42 = arith.addf %39, %41 : vector<16x128xf32>
    %c0_19 = arith.constant 0 : index
    %c0_20 = arith.constant 0 : index
    %43 = vector.load %arg6[%c0_19, %c0_20] : memref<16x128xf32, #tpu.memory_space<vmem>>, vector<16x128xf32>
    tpu.vector_store %arg6[%c0_19, %c0_20], %42 {strides = array<i32>} : memref<16x128xf32, #tpu.memory_space<vmem>>, vector<16x128xf32>,
    return
  }
  func.func @transform_0(%arg0: i32) -> (i32, i32) {
    %c0_i32 = arith.constant 0 : i32
    %c0_i32_0 = arith.constant 0 : i32
    return %arg0, %c0_i32 : i32, i32
  }
  func.func @transform_1(%arg0: i32) -> (i32, i32) {
    %c0_i32 = arith.constant 0 : i32
    %c0_i32_0 = arith.constant 0 : i32
    %c0_i32_1 = arith.constant 0 : i32
    return %c0_i32, %c0_i32_0 : i32, i32
  }
  func.func @transform_2(%arg0: i32) -> (i32, i32) {
    %c0_i32 = arith.constant 0 : i32
    %c0_i32_0 = arith.constant 0 : i32
    %c0_i32_1 = arith.constant 0 : i32
    return %c0_i32, %c0_i32_0 : i32, i32
  }
  func.func @transform_3(%arg0: i32) -> (i32, i32) {
    %c0_i32 = arith.constant 0 : i32
    %c0_i32_0 = arith.constant 0 : i32
    %c0_i32_1 = arith.constant 0 : i32
    return %c0_i32, %c0_i32_0 : i32, i32
  }
  func.func @transform_4(%arg0: i32) -> (i32, i32) {
    %c0_i32 = arith.constant 0 : i32
    %c0_i32_0 = arith.constant 0 : i32
    %c0_i32_1 = arith.constant 0 : i32
    return %c0_i32, %c0_i32_0 : i32, i32
  }
  func.func @transform_5(%arg0: i32) -> (i32, i32) {
    %c0_i32 = arith.constant 0 : i32
    %c0_i32_0 = arith.constant 0 : i32
    return %arg0, %c0_i32 : i32, i32
  }
}

module attributes {stable_mosaic.version = 11 : i64} {
  func.func @_head_transform_kernel(%arg0: i32, %arg1: memref<16x128xf32, #tpu.memory_space<vmem>>, %arg2: memref<128x128xf32, #tpu.memory_space<vmem>>, %arg3: memref<1x128xf32, #tpu.memory_space<vmem>>, %arg4: memref<1x128xf32, #tpu.memory_space<vmem>>, %arg5: memref<1x128xf32, #tpu.memory_space<vmem>>, %arg6: memref<16x128xf32, #tpu.memory_space<vmem>>) attributes {dimension_semantics = [#tpu.dimension_semantics<parallel>], iteration_bounds = array<i64: 1>, scalar_prefetch = 0 : i64, scratch_operands = 0 : i64, tpu.core_type = #tpu.core_type<tc>, window_params = [{transform_indices = @transform_0, window_bounds = array<i64: 16, 128>}, {pipeline_mode = #tpu.pipeline_mode<synchronous>, transform_indices = @transform_1, window_bounds = array<i64: 128, 128>}, {pipeline_mode = #tpu.pipeline_mode<synchronous>, transform_indices = @transform_2, window_bounds = array<i64: 1, 128>}, {pipeline_mode = #tpu.pipeline_mode<synchronous>, transform_indices = @transform_3, window_bounds = array<i64: 1, 128>}, {pipeline_mode = #tpu.pipeline_mode<synchronous>, transform_indices = @transform_4, window_bounds = array<i64: 1, 128>}, {transform_indices = @transform_5, window_bounds = array<i64: 16, 128>}]} {
    %c0 = arith.constant 0 : index
    %c0_0 = arith.constant 0 : index
    %0 = vector.load %arg1[%c0, %c0_0] : memref<16x128xf32, #tpu.memory_space<vmem>>, vector<16x128xf32>
    %c0_1 = arith.constant 0 : index
    %c0_2 = arith.constant 0 : index
    %1 = vector.load %arg2[%c0_1, %c0_2] : memref<128x128xf32, #tpu.memory_space<vmem>>, vector<128x128xf32>
    %cst = arith.constant dense<0.000000e+00> : vector<16x128xf32>
    %2 = tpu.matmul %0, %1, %cst {dimension_numbers = #tpu.dot_dimension_numbers<[1], [0], [0], [1], [0, 0, 1, 1], [], []>} : vector<16x128xf32>, vector<128x128xf32>, vector<16x128xf32> -> vector<16x128xf32>
    %c0_3 = arith.constant 0 : index
    %c0_4 = arith.constant 0 : index
    %3 = vector.load %arg3[%c0_3, %c0_4] : memref<1x128xf32, #tpu.memory_space<vmem>>, vector<1x128xf32>
    %4 = vector.broadcast %3 : vector<1x128xf32> to vector<16x128xf32>
    %5 = arith.addf %2, %4 : vector<16x128xf32>
    %cst_5 = arith.constant 5.000000e-01 : f32
    %6 = vector.broadcast %cst_5 : f32 to vector<16x128xf32>
    %7 = arith.mulf %6, %5 : vector<16x128xf32>
    %cst_6 = arith.constant 0.707106769 : f32
    %8 = vector.broadcast %cst_6 : f32 to vector<16x128xf32>
    %9 = arith.mulf %5, %8 : vector<16x128xf32>
    %10 = math.erf %9 : vector<16x128xf32>
    %cst_7 = arith.constant 1.000000e+00 : f32
    %11 = vector.broadcast %cst_7 : f32 to vector<16x128xf32>
    %12 = arith.addf %11, %10 : vector<16x128xf32>
    %13 = arith.mulf %7, %12 : vector<16x128xf32>
    %14 = tpu.iota {dimensions = array<i32: 1>} : vector<16x128xi32>
    %c32_i32 = arith.constant 32 : i32
    %15 = vector.broadcast %c32_i32 : i32 to vector<16x128xi32>
    %16 = arith.cmpi slt, %14, %15 : vector<16x128xi32>
    %cst_8 = arith.constant 0.000000e+00 : f32
    %17 = vector.broadcast %cst_8 : f32 to vector<16x128xf32>
    %18 = arith.select %16, %13, %17 : vector<16x128xi1>, vector<16x128xf32>
    %cst_9 = arith.constant dense<0.000000e+00> : vector<16xf32>
    %19 = vector.multi_reduction <add>, %18, %cst_9 [1] : vector<16x128xf32> to vector<16xf32>
    %20 = vector.shape_cast %19 : vector<16xf32> to vector<16x1xf32>
    %cst_10 = arith.constant 3.125000e-02 : f32
    %21 = vector.broadcast %cst_10 : f32 to vector<16x1xf32>
    %22 = arith.mulf %20, %21 : vector<16x1xf32>
    %23 = vector.broadcast %22 : vector<16x1xf32> to vector<16x128xf32>
    %24 = arith.subf %18, %23 : vector<16x128xf32>
    %cst_11 = arith.constant 0.000000e+00 : f32
    %25 = vector.broadcast %cst_11 : f32 to vector<16x128xf32>
    %26 = arith.select %16, %24, %25 : vector<16x128xi1>, vector<16x128xf32>
    %27 = arith.mulf %26, %26 : vector<16x128xf32>
    %cst_12 = arith.constant dense<0.000000e+00> : vector<16xf32>
    %28 = vector.multi_reduction <add>, %27, %cst_12 [1] : vector<16x128xf32> to vector<16xf32>
    %29 = vector.shape_cast %28 : vector<16xf32> to vector<16x1xf32>
    %cst_13 = arith.constant 3.125000e-02 : f32
    %30 = vector.broadcast %cst_13 : f32 to vector<16x1xf32>
    %31 = arith.mulf %29, %30 : vector<16x1xf32>
    %cst_14 = arith.constant 9.99999996E-13 : f32
    %32 = vector.broadcast %cst_14 : f32 to vector<16x1xf32>
    %33 = arith.addf %31, %32 : vector<16x1xf32>
    %34 = math.rsqrt %33 : vector<16x1xf32>
    %35 = vector.broadcast %34 : vector<16x1xf32> to vector<16x128xf32>
    %36 = arith.mulf %26, %35 : vector<16x128xf32>
    %c0_15 = arith.constant 0 : index
    %c0_16 = arith.constant 0 : index
    %37 = vector.load %arg4[%c0_15, %c0_16] : memref<1x128xf32, #tpu.memory_space<vmem>>, vector<1x128xf32>
    %38 = vector.broadcast %37 : vector<1x128xf32> to vector<16x128xf32>
    %39 = arith.mulf %36, %38 : vector<16x128xf32>
    %c0_17 = arith.constant 0 : index
    %c0_18 = arith.constant 0 : index
    %40 = vector.load %arg5[%c0_17, %c0_18] : memref<1x128xf32, #tpu.memory_space<vmem>>, vector<1x128xf32>
    %41 = vector.broadcast %40 : vector<1x128xf32> to vector<16x128xf32>
    %42 = arith.addf %39, %41 : vector<16x128xf32>
    %c0_19 = arith.constant 0 : index
    %c0_20 = arith.constant 0 : index
    %43 = vector.load %arg6[%c0_19, %c0_20] : memref<16x128xf32, #tpu.memory_space<vmem>>, vector<16x128xf32>
    tpu.vector_store %arg6[%c0_19, %c0_20], %42 {strides = array<i32>} : memref<16x128xf32, #tpu.memory_space<vmem>>, vector<16x128xf32>,
    return
  }
  func.func @transform_0(%arg0: i32) -> (i32, i32) {
    %c0_i32 = arith.constant 0 : i32
    %c0_i32_0 = arith.constant 0 : i32
    return %arg0, %c0_i32 : i32, i32
  }
  func.func @transform_1(%arg0: i32) -> (i32, i32) {
    %c0_i32 = arith.constant 0 : i32
    %c0_i32_0 = arith.constant 0 : i32
    %c0_i32_1 = arith.constant 0 : i32
    return %c0_i32, %c0_i32_0 : i32, i32
  }
  func.func @transform_2(%arg0: i32) -> (i32, i32) {
    %c0_i32 = arith.constant 0 : i32
    %c0_i32_0 = arith.constant 0 : i32
    %c0_i32_1 = arith.constant 0 : i32
    return %c0_i32, %c0_i32_0 : i32, i32
  }
  func.func @transform_3(%arg0: i32) -> (i32, i32) {
    %c0_i32 = arith.constant 0 : i32
    %c0_i32_0 = arith.constant 0 : i32
    %c0_i32_1 = arith.constant 0 : i32
    return %c0_i32, %c0_i32_0 : i32, i32
  }
  func.func @transform_4(%arg0: i32) -> (i32, i32) {
    %c0_i32 = arith.constant 0 : i32
    %c0_i32_0 = arith.constant 0 : i32
    %c0_i32_1 = arith.constant 0 : i32
    return %c0_i32, %c0_i32_0 : i32, i32
  }
  func.func @transform_5(%arg0: i32) -> (i32, i32) {
    %c0_i32 = arith.constant 0 : i32
    %c0_i32_0 = arith.constant 0 : i32
    return %arg0, %c0_i32 : i32, i32
  }
}

</mosaic_0001>

<llo_original>
// kernel: tpu_custom_call.1
$region0: #{tpu_custom_call.1}
  #allocation0 [shape = 'u32[]', space=smem, size = 0x4, offset = 0x4, fixed_abs, tag = 'smem constant byte address 0x4 - core index']
  #allocation1 [shape = 'u32[144,128]{1,0:T(1,128)}', space=vmem, size = 0x12000, scoped, tag = 'internal scratch']
  %s0 = inlined_call_operand.hbm [shape: f32[16,128], index: 0, kind: input, shape index: {}]
  %s1 = inlined_call_operand.hbm [shape: f32[128,128], index: 1, kind: input, shape index: {}]
  %s2 = inlined_call_operand.vmem [shape: f32[1,128], index: 2, kind: input, shape index: {}]
  %s3 = inlined_call_operand.vmem [shape: f32[1,128], index: 3, kind: input, shape index: {}]
  %s4 = inlined_call_operand.vmem [shape: f32[1,128], index: 4, kind: input, shape index: {}]
  %s5 = inlined_call_operand.hbm [shape: f32[16,128], index: 5, kind: output, shape index: {}]
  %s6 = sld [smem:[#allocation0]]
  $region38: #{tpu_custom_call.1} parent=0
    _
  %s8 = ssub.s32 1, %s6
  %s9 = scalar_select 0, %s8, %s6
  $region1: #{tpu_custom_call.1} parent=0
    #allocation2 [shape = 'u8[8192]{0}', space=vmem, size = 0x2000, scoped, tag = 'input window, operand 0, single buffered']
    #allocation3 [shape = 's32[1]{0}', space=sflag, size = 0x4, scoped, tag = 'scoped memory for tpu_custom_call.1']
    #allocation4 [shape = 's32[1]{0}', space=sflag, size = 0x4, scoped, tag = 'scoped memory for tpu_custom_call.1']
    #allocation5 [shape = 'u8[65536]{0}', space=vmem, size = 0x10000, scoped, tag = 'input window, operand 1, single buffered']
    #allocation6 [shape = 's32[1]{0}', space=sflag, size = 0x4, scoped, tag = 'scoped memory for tpu_custom_call.1']
    #allocation7 [shape = 'u8[8192]{0}', space=vmem, size = 0x2000, scoped, tag = 'output window, operand 0, single buffered']
    %10 = vsyncpa [#allocation3], 0
    %11 = vsyncpa [#allocation6], 0
    %12 = vsyncpa [#allocation4], 0
    // Predicated region
    $region2: #{tpu_custom_call.1} parent=1 // pred_check
      _
    $region3: #{tpu_custom_call.1} parent=1 // pred_check_branch
      %14 = sbr.rel (0) target = $region5
    $region4: #{tpu_custom_call.1} parent=1 // pred_region
      %s16 = ssub.s32 256, 256
      %17 = vsyncadd [#allocation3], %s16
      %s18 = sshll.u32 [#allocation2], 4
      %s19 = int_to_ptr.vmem [resolvable:$true] %s18
      %24 = dma.hbm_to_vmem [thread:$0]  %s0, 256, %s19, [#allocation3], 128, 128, 8
    $region5: #{tpu_custom_call.1} parent=1 // pred_fallthru
      _
    // Predicated region
    $region6: #{tpu_custom_call.1} parent=1 // pred_check
      _
    $region7: #{tpu_custom_call.1} parent=1 // pred_check_branch
      %26 = sbr.rel (0) target = $region9
    $region8: #{tpu_custom_call.1} parent=1 // pred_region
      %s28 = ssub.s32 2048, 2048
      %29 = vsyncadd [#allocation6], %s28
      %s30 = sshll.u32 [#allocation5], 4
      %s31 = int_to_ptr.vmem [resolvable:$true] %s30
      %36 = dma.hbm_to_vmem [thread:$0]  %s1, 2048, %s31, [#allocation6], 128, 128, 8
    $region9: #{tpu_custom_call.1} parent=1 // pred_fallthru
      _
    // Predicated region
    $region10: #{tpu_custom_call.1} parent=1 // pred_check
      _
    $region11: #{tpu_custom_call.1} parent=1 // pred_check_branch
      %38 = sbr.rel (0) target = $region13
    $region12: #{tpu_custom_call.1} parent=1 // pred_region
      _
    $region13: #{tpu_custom_call.1} parent=1 // pred_fallthru
      _
    // Predicated region
    $region14: #{tpu_custom_call.1} parent=1 // pred_check
      _
    $region15: #{tpu_custom_call.1} parent=1 // pred_check_branch
      %40 = sbr.rel (0) target = $region17
    $region16: #{tpu_custom_call.1} parent=1 // pred_region
      _
    $region17: #{tpu_custom_call.1} parent=1 // pred_fallthru
      _
    // Predicated region
    $region18: #{tpu_custom_call.1} parent=1 // pred_check
      _
    $region19: #{tpu_custom_call.1} parent=1 // pred_check_branch
      %42 = sbr.rel (0) target = $region21
    $region20: #{tpu_custom_call.1} parent=1 // pred_region
      _
    $region21: #{tpu_custom_call.1} parent=1 // pred_fallthru
      _
    // Predicated region
    $region22: #{tpu_custom_call.1} parent=1 // pred_check
      _
    $region23: #{tpu_custom_call.1} parent=1 // pred_check_branch
      %44 = sbr.rel (0) target = $region25
    $region24: #{tpu_custom_call.1} parent=1 // pred_region
      %45 = dma.done [#allocation3], 256
    $region25: #{tpu_custom_call.1} parent=1 // pred_fallthru
      _
    // Predicated region
    $region26: #{tpu_custom_call.1} parent=1 // pred_check
      _
    $region27: #{tpu_custom_call.1} parent=1 // pred_check_branch
      %47 = sbr.rel (0) target = $region29
    $region28: #{tpu_custom_call.1} parent=1 // pred_region
      %48 = dma.done [#allocation6], 2048
    $region29: #{tpu_custom_call.1} parent=1 // pred_fallthru
      _
    %v49 = vld [vmem:[#allocation2] sm:$0xff]
    %v50 = vld [vmem:[#allocation2 + $0x8] sm:$0xff]
    %v51 = vld [vmem:[#allocation5] sm:$0xff]
    %v52 = vld [vmem:[#allocation5 + $0x8] sm:$0xff]
    %v53 = vld [vmem:[#allocation5 + $0x10] sm:$0xff]
    %v54 = vld [vmem:[#allocation5 + $0x18] sm:$0xff]
    %v55 = vld [vmem:[#allocation5 + $0x20] sm:$0xff]
    %v56 = vld [vmem:[#allocation5 + $0x28] sm:$0xff]
    %v57 = vld [vmem:[#allocation5 + $0x30] sm:$0xff]
    %v58 = vld [vmem:[#allocation5 + $0x38] sm:$0xff]
    %v59 = vld [vmem:[#allocation5 + $0x40] sm:$0xff]
    %v60 = vld [vmem:[#allocation5 + $0x48] sm:$0xff]
    %v61 = vld [vmem:[#allocation5 + $0x50] sm:$0xff]
    %v62 = vld [vmem:[#allocation5 + $0x58] sm:$0xff]
    %v63 = vld [vmem:[#allocation5 + $0x60] sm:$0xff]
    %v64 = vld [vmem:[#allocation5 + $0x68] sm:$0xff]
    %v65 = vld [vmem:[#allocation5 + $0x70] sm:$0xff]
    %v66 = vld [vmem:[#allocation5 + $0x78] sm:$0xff]
    %v67 = vld [vmem:[%s2] sm:$0x1]
    %v69 = vlaneseq
    %v70 = vshrl.u32 %v69, 7
    %v71 = vsub.s32 0, %v70
    %v72 = vrot.slane %v67, %v71
    %74 = vmatprep.subr.mxu0 0.0
    %75 = vmatpush1.msra.mxu0 %v66
    %76 = vmatprep.subr.mxu0 0.0
    %77 = vmatpush1.msra.mxu0 %v65
    %78 = vmatprep.subr.mxu0 0.0
    %79 = vmatpush1.msra.mxu0 %v64
    %80 = vmatprep.subr.mxu0 0.0
    %81 = vmatpush1.msra.mxu0 %v63
    %82 = vmatprep.subr.mxu0 0.0
    %83 = vmatpush1.msra.mxu0 %v62
    %84 = vmatprep.subr.mxu0 0.0
    %85 = vmatpush1.msra.mxu0 %v61
    %86 = vmatprep.subr.mxu0 0.0
    %87 = vmatpush1.msra.mxu0 %v60
    %88 = vmatprep.subr.mxu0 0.0
    %89 = vmatpush1.msra.mxu0 %v59
    %90 = vmatprep.subr.mxu0 0.0
    %91 = vmatpush1.msra.mxu0 %v58
    %92 = vmatprep.subr.mxu0 0.0
    %93 = vmatpush1.msra.mxu0 %v57
    %94 = vmatprep.subr.mxu0 0.0
    %95 = vmatpush1.msra.mxu0 %v56
    %96 = vmatprep.subr.mxu0 0.0
    %97 = vmatpush1.msra.mxu0 %v55
    %98 = vmatprep.subr.mxu0 0.0
    %99 = vmatpush1.msra.mxu0 %v54
    %100 = vmatprep.subr.mxu0 0.0
    %101 = vmatpush1.msra.mxu0 %v53
    %102 = vmatprep.subr.mxu0 0.0
    %103 = vmatpush1.msra.mxu0 %v52
    %104 = vmatprep.subr.mxu0 0.0
    %105 = vmatpush1.msra.mxu0 %v51
    %106 = vmatprep.subr.mxu0 0.0
    %107 = vmatpush2.msra.mxu0 0.0
    %108 = vmatprep.subr.mxu0 0.0
    %109 = vmatpush2.msra.mxu0 0.0
    %110 = vmatprep.subr.mxu0 0.0
    %111 = vmatpush2.msra.mxu0 0.0
    %112 = vmatprep.subr.mxu0 0.0
    %113 = vmatpush2.msra.mxu0 0.0
    %114 = vmatprep.subr.mxu0 0.0
    %115 = vmatpush2.msra.mxu0 0.0
    %116 = vmatprep.subr.mxu0 0.0
    %117 = vmatpush2.msra.mxu0 0.0
    %118 = vmatprep.subr.mxu0 0.0
    %119 = vmatpush2.msra.mxu0 0.0
    %120 = vmatprep.subr.mxu0 0.0
    %121 = vmatpush2.msra.mxu0 0.0
    %122 = vmatprep.subr.mxu0 0.0
    %123 = vmatpush2.msra.mxu0 0.0
    %124 = vmatprep.subr.mxu0 0.0
    %125 = vmatpush2.msra.mxu0 0.0
    %126 = vmatprep.subr.mxu0 0.0
    %127 = vmatpush2.msra.mxu0 0.0
    %128 = vmatprep.subr.mxu0 0.0
    %129 = vmatpush2.msra.mxu0 0.0
    %130 = vmatprep.subr.mxu0 0.0
    %131 = vmatpush2.msra.mxu0 0.0
    %132 = vmatprep.subr.mxu0 0.0
    %133 = vmatpush2.msra.mxu0 0.0
    %134 = vmatprep.subr.mxu0 0.0
    %135 = vmatpush2.msra.mxu0 0.0
    %136 = vmatprep.subr.mxu0 0.0
    %137 = vmatpush2.msra.mxu0 0.0
    %138 = vmatprep.mubr.f32.mxu0 0.0
    %139 = vmatmul.mubr.f32.gmra.mxu0 %v49
    %v140 = vpop.f32.mrf.mxu0
    %v141 = vadd.f32 %v72, %v140
    %v142 = vpop.f32.mrf.mxu0
    %143 = vmatprep.mubr.f32.mxu0 0.0
    %144 = vmatmul.mubr.f32.gmra.mxu0 %v50
    %v145 = vpop.f32.mrf.mxu0
    %v146 = vadd.f32 %v72, %v145
    %v147 = vpop.f32.mrf.mxu0
    %148 = vdwg.mxu0
    %v149 = vmul.f32 %v141, 0.5
    %v150 = vmul.f32 %v146, 0.5
    %v151 = vmul.f32 %v141, 0.70710677
    %v152 = vmul.f32 %v146, 0.70710677
    %v153 = verf.f32.pop %v151
    %v154 = verf.f32.pop %v152
    %v155 = vadd.f32 %v153, 1.0
    %v156 = vadd.f32 %v154, 1.0
    %v157 = vmul.f32 %v149, %v155
    %v158 = vmul.f32 %v150, %v156
    %v159 = vlaneseq
    %v160 = vand.u32 %v159, 127
    %vm161 = vcmp.lt.s32.totalorder %v160, 32
    %v162 = vsel %vm161, %v157, 0.0
    %v163 = vsel %vm161, %v158, 0.0
    %164 = vadd.xlane.f32.xlu0 %v162
    %v165 = vpop.xlane.xlu0 %164
    %166 = vadd.xlane.f32.xlu0 %v163
    %v167 = vpop.xlane.xlu0 %166
    %v168 = vmul.f32 %v165, 0.03125
    %v169 = vmul.f32 %v167, 0.03125
    %v170 = vsub.f32 %v162, %v168
    %v171 = vsub.f32 %v163, %v169
    %v172 = vsel %vm161, %v170, 0.0
    %v173 = vsel %vm161, %v171, 0.0
    %v174 = vmul.f32 %v172, %v172
    %v175 = vmul.f32 %v173, %v173
    %176 = vadd.xlane.f32.xlu0 %v174
    %v177 = vpop.xlane.xlu0 %176
    %178 = vadd.xlane.f32.xlu0 %v175
    %v179 = vpop.xlane.xlu0 %178
    %v180 = vmul.f32 %v177, 0.03125
    %v181 = vmul.f32 %v179, 0.03125
    %v182 = vadd.f32 %v180, 1e-12
    %v183 = vadd.f32 %v181, 1e-12
    %v184 = vrsqrt.pop %v182
    %v185 = vrsqrt.pop %v183
    %v186 = vmul.f32 %v172, %v184
    %v187 = vmul.f32 %v173, %v185
    %v188 = vld [vmem:[%s3] sm:$0x1]
    %v190 = vlaneseq
    %v191 = vshrl.u32 %v190, 7
    %v192 = vsub.s32 0, %v191
    %v193 = vrot.slane %v188, %v192
    %v195 = vmul.f32 %v186, %v193
    %v196 = vmul.f32 %v187, %v193
    %v197 = vld [vmem:[%s4] sm:$0x1]
    %v199 = vlaneseq
    %v200 = vshrl.u32 %v199, 7
    %v201 = vsub.s32 0, %v200
    %v202 = vrot.slane %v197, %v201
    %v204 = vadd.f32 %v195, %v202
    %v205 = vadd.f32 %v196, %v202
    %206 = vst [vmem:[#allocation7] sm:$0xff] %v204
    %207 = vst [vmem:[#allocation7 + $0x8] sm:$0xff] %v205
    // Predicated region
    $region30: #{tpu_custom_call.1} parent=1 // pred_check
      _
    $region31: #{tpu_custom_call.1} parent=1 // pred_check_branch
      %209 = sbr.rel (0) target = $region33
    $region32: #{tpu_custom_call.1} parent=1 // pred_region
      %s211 = ssub.s32 256, 256
      %212 = vsyncadd [#allocation4], %s211
      %s213 = sshll.u32 [#allocation7], 4
      %s214 = int_to_ptr.vmem [resolvable:$true] %s213
      %219 = dma.vmem_to_hbm [thread:$0]  %s214, 256, %s5, [#allocation4], 128, 128, 8
    $region33: #{tpu_custom_call.1} parent=1 // pred_fallthru
      _
    // Predicated region
    $region34: #{tpu_custom_call.1} parent=1 // pred_check
      _
    $region35: #{tpu_custom_call.1} parent=1 // pred_check_branch
      %221 = sbr.rel (0) target = $region37
    $region36: #{tpu_custom_call.1} parent=1 // pred_region
      %222 = dma.done [#allocation4], 256
    $region37: #{tpu_custom_call.1} parent=1 // pred_fallthru
      _
    %223 = vsyncpa [#allocation3], 1
    %224 = vsyncpa [#allocation6], 1
    %225 = vsyncpa [#allocation4], 1

// kernel: tpu_custom_call.1
$region0: #{tpu_custom_call.1}
  #allocation0 [shape = 'u32[]', space=smem, size = 0x4, offset = 0x4, fixed_abs, tag = 'smem constant byte address 0x4 - core index']
  #allocation1 [shape = 'u32[144,128]{1,0:T(1,128)}', space=vmem, size = 0x12000, scoped, tag = 'internal scratch']
  %s0 = inlined_call_operand.hbm [shape: f32[16,128], index: 0, kind: input, shape index: {}]
  %s1 = inlined_call_operand.hbm [shape: f32[128,128], index: 1, kind: input, shape index: {}]
  %s2 = inlined_call_operand.vmem [shape: f32[1,128], index: 2, kind: input, shape index: {}]
  %s3 = inlined_call_operand.vmem [shape: f32[1,128], index: 3, kind: input, shape index: {}]
  %s4 = inlined_call_operand.vmem [shape: f32[1,128], index: 4, kind: input, shape index: {}]
  %s5 = inlined_call_operand.hbm [shape: f32[16,128], index: 5, kind: output, shape index: {}]
  %s6 = sld [smem:[#allocation0]]
  $region38: #{tpu_custom_call.1} parent=0
    _
  %s8 = ssub.s32 1, %s6
  %s9 = scalar_select 0, %s8, %s6
  $region1: #{tpu_custom_call.1} parent=0
    #allocation2 [shape = 'u8[8192]{0}', space=vmem, size = 0x2000, scoped, tag = 'input window, operand 0, single buffered']
    #allocation3 [shape = 's32[1]{0}', space=sflag, size = 0x4, scoped, tag = 'scoped memory for tpu_custom_call.1']
    #allocation4 [shape = 's32[1]{0}', space=sflag, size = 0x4, scoped, tag = 'scoped memory for tpu_custom_call.1']
    #allocation5 [shape = 'u8[65536]{0}', space=vmem, size = 0x10000, scoped, tag = 'input window, operand 1, single buffered']
    #allocation6 [shape = 's32[1]{0}', space=sflag, size = 0x4, scoped, tag = 'scoped memory for tpu_custom_call.1']
    #allocation7 [shape = 'u8[8192]{0}', space=vmem, size = 0x2000, scoped, tag = 'output window, operand 0, single buffered']
    %10 = vsyncpa [#allocation3], 0
    %11 = vsyncpa [#allocation6], 0
    %12 = vsyncpa [#allocation4], 0
    // Predicated region
    $region2: #{tpu_custom_call.1} parent=1 // pred_check
      _
    $region3: #{tpu_custom_call.1} parent=1 // pred_check_branch
      %14 = sbr.rel (0) target = $region5
    $region4: #{tpu_custom_call.1} parent=1 // pred_region
      %s16 = ssub.s32 256, 256
      %17 = vsyncadd [#allocation3], %s16
      %s18 = sshll.u32 [#allocation2], 4
      %s19 = int_to_ptr.vmem [resolvable:$true] %s18
      %24 = dma.hbm_to_vmem [thread:$0]  %s0, 256, %s19, [#allocation3], 128, 128, 8
    $region5: #{tpu_custom_call.1} parent=1 // pred_fallthru
      _
    // Predicated region
    $region6: #{tpu_custom_call.1} parent=1 // pred_check
      _
    $region7: #{tpu_custom_call.1} parent=1 // pred_check_branch
      %26 = sbr.rel (0) target = $region9
    $region8: #{tpu_custom_call.1} parent=1 // pred_region
      %s28 = ssub.s32 2048, 2048
      %29 = vsyncadd [#allocation6], %s28
      %s30 = sshll.u32 [#allocation5], 4
      %s31 = int_to_ptr.vmem [resolvable:$true] %s30
      %36 = dma.hbm_to_vmem [thread:$0]  %s1, 2048, %s31, [#allocation6], 128, 128, 8
    $region9: #{tpu_custom_call.1} parent=1 // pred_fallthru
      _
    // Predicated region
    $region10: #{tpu_custom_call.1} parent=1 // pred_check
      _
    $region11: #{tpu_custom_call.1} parent=1 // pred_check_branch
      %38 = sbr.rel (0) target = $region13
    $region12: #{tpu_custom_call.1} parent=1 // pred_region
      _
    $region13: #{tpu_custom_call.1} parent=1 // pred_fallthru
      _
    // Predicated region
    $region14: #{tpu_custom_call.1} parent=1 // pred_check
      _
    $region15: #{tpu_custom_call.1} parent=1 // pred_check_branch
      %40 = sbr.rel (0) target = $region17
    $region16: #{tpu_custom_call.1} parent=1 // pred_region
      _
    $region17: #{tpu_custom_call.1} parent=1 // pred_fallthru
      _
    // Predicated region
    $region18: #{tpu_custom_call.1} parent=1 // pred_check
      _
    $region19: #{tpu_custom_call.1} parent=1 // pred_check_branch
      %42 = sbr.rel (0) target = $region21
    $region20: #{tpu_custom_call.1} parent=1 // pred_region
      _
    $region21: #{tpu_custom_call.1} parent=1 // pred_fallthru
      _
    // Predicated region
    $region22: #{tpu_custom_call.1} parent=1 // pred_check
      _
    $region23: #{tpu_custom_call.1} parent=1 // pred_check_branch
      %44 = sbr.rel (0) target = $region25
    $region24: #{tpu_custom_call.1} parent=1 // pred_region
      %45 = dma.done [#allocation3], 256
    $region25: #{tpu_custom_call.1} parent=1 // pred_fallthru
      _
    // Predicated region
    $region26: #{tpu_custom_call.1} parent=1 // pred_check
      _
    $region27: #{tpu_custom_call.1} parent=1 // pred_check_branch
      %47 = sbr.rel (0) target = $region29
    $region28: #{tpu_custom_call.1} parent=1 // pred_region
      %48 = dma.done [#allocation6], 2048
    $region29: #{tpu_custom_call.1} parent=1 // pred_fallthru
      _
    %v49 = vld [vmem:[#allocation2] sm:$0xff]
    %v50 = vld [vmem:[#allocation2 + $0x8] sm:$0xff]
    %v51 = vld [vmem:[#allocation5] sm:$0xff]
    %v52 = vld [vmem:[#allocation5 + $0x8] sm:$0xff]
    %v53 = vld [vmem:[#allocation5 + $0x10] sm:$0xff]
    %v54 = vld [vmem:[#allocation5 + $0x18] sm:$0xff]
    %v55 = vld [vmem:[#allocation5 + $0x20] sm:$0xff]
    %v56 = vld [vmem:[#allocation5 + $0x28] sm:$0xff]
    %v57 = vld [vmem:[#allocation5 + $0x30] sm:$0xff]
    %v58 = vld [vmem:[#allocation5 + $0x38] sm:$0xff]
    %v59 = vld [vmem:[#allocation5 + $0x40] sm:$0xff]
    %v60 = vld [vmem:[#allocation5 + $0x48] sm:$0xff]
    %v61 = vld [vmem:[#allocation5 + $0x50] sm:$0xff]
    %v62 = vld [vmem:[#allocation5 + $0x58] sm:$0xff]
    %v63 = vld [vmem:[#allocation5 + $0x60] sm:$0xff]
    %v64 = vld [vmem:[#allocation5 + $0x68] sm:$0xff]
    %v65 = vld [vmem:[#allocation5 + $0x70] sm:$0xff]
    %v66 = vld [vmem:[#allocation5 + $0x78] sm:$0xff]
    %v67 = vld [vmem:[%s2] sm:$0x1]
    %v69 = vlaneseq
    %v70 = vshrl.u32 %v69, 7
    %v71 = vsub.s32 0, %v70
    %v72 = vrot.slane %v67, %v71
    %74 = vmatprep.subr.mxu0 0.0
    %75 = vmatpush1.msra.mxu0 %v66
    %76 = vmatprep.subr.mxu0 0.0
    %77 = vmatpush1.msra.mxu0 %v65
    %78 = vmatprep.subr.mxu0 0.0
    %79 = vmatpush1.msra.mxu0 %v64
    %80 = vmatprep.subr.mxu0 0.0
    %81 = vmatpush1.msra.mxu0 %v63
    %82 = vmatprep.subr.mxu0 0.0
    %83 = vmatpush1.msra.mxu0 %v62
    %84 = vmatprep.subr.mxu0 0.0
    %85 = vmatpush1.msra.mxu0 %v61
    %86 = vmatprep.subr.mxu0 0.0
    %87 = vmatpush1.msra.mxu0 %v60
    %88 = vmatprep.subr.mxu0 0.0
    %89 = vmatpush1.msra.mxu0 %v59
    %90 = vmatprep.subr.mxu0 0.0
    %91 = vmatpush1.msra.mxu0 %v58
    %92 = vmatprep.subr.mxu0 0.0
    %93 = vmatpush1.msra.mxu0 %v57
    %94 = vmatprep.subr.mxu0 0.0
    %95 = vmatpush1.msra.mxu0 %v56
    %96 = vmatprep.subr.mxu0 0.0
    %97 = vmatpush1.msra.mxu0 %v55
    %98 = vmatprep.subr.mxu0 0.0
    %99 = vmatpush1.msra.mxu0 %v54
    %100 = vmatprep.subr.mxu0 0.0
    %101 = vmatpush1.msra.mxu0 %v53
    %102 = vmatprep.subr.mxu0 0.0
    %103 = vmatpush1.msra.mxu0 %v52
    %104 = vmatprep.subr.mxu0 0.0
    %105 = vmatpush1.msra.mxu0 %v51
    %106 = vmatprep.subr.mxu0 0.0
    %107 = vmatpush2.msra.mxu0 0.0
    %108 = vmatprep.subr.mxu0 0.0
    %109 = vmatpush2.msra.mxu0 0.0
    %110 = vmatprep.subr.mxu0 0.0
    %111 = vmatpush2.msra.mxu0 0.0
    %112 = vmatprep.subr.mxu0 0.0
    %113 = vmatpush2.msra.mxu0 0.0
    %114 = vmatprep.subr.mxu0 0.0
    %115 = vmatpush2.msra.mxu0 0.0
    %116 = vmatprep.subr.mxu0 0.0
    %117 = vmatpush2.msra.mxu0 0.0
    %118 = vmatprep.subr.mxu0 0.0
    %119 = vmatpush2.msra.mxu0 0.0
    %120 = vmatprep.subr.mxu0 0.0
    %121 = vmatpush2.msra.mxu0 0.0
    %122 = vmatprep.subr.mxu0 0.0
    %123 = vmatpush2.msra.mxu0 0.0
    %124 = vmatprep.subr.mxu0 0.0
    %125 = vmatpush2.msra.mxu0 0.0
    %126 = vmatprep.subr.mxu0 0.0
    %127 = vmatpush2.msra.mxu0 0.0
    %128 = vmatprep.subr.mxu0 0.0
    %129 = vmatpush2.msra.mxu0 0.0
    %130 = vmatprep.subr.mxu0 0.0
    %131 = vmatpush2.msra.mxu0 0.0
    %132 = vmatprep.subr.mxu0 0.0
    %133 = vmatpush2.msra.mxu0 0.0
    %134 = vmatprep.subr.mxu0 0.0
    %135 = vmatpush2.msra.mxu0 0.0
    %136 = vmatprep.subr.mxu0 0.0
    %137 = vmatpush2.msra.mxu0 0.0
    %138 = vmatprep.mubr.f32.mxu0 0.0
    %139 = vmatmul.mubr.f32.gmra.mxu0 %v49
    %v140 = vpop.f32.mrf.mxu0
    %v141 = vadd.f32 %v72, %v140
    %v142 = vpop.f32.mrf.mxu0
    %143 = vmatprep.mubr.f32.mxu0 0.0
    %144 = vmatmul.mubr.f32.gmra.mxu0 %v50
    %v145 = vpop.f32.mrf.mxu0
    %v146 = vadd.f32 %v72, %v145
    %v147 = vpop.f32.mrf.mxu0
    %148 = vdwg.mxu0
    %v149 = vmul.f32 %v141, 0.5
    %v150 = vmul.f32 %v146, 0.5
    %v151 = vmul.f32 %v141, 0.70710677
    %v152 = vmul.f32 %v146, 0.70710677
    %v153 = verf.f32.pop %v151
    %v154 = verf.f32.pop %v152
    %v155 = vadd.f32 %v153, 1.0
    %v156 = vadd.f32 %v154, 1.0
    %v157 = vmul.f32 %v149, %v155
    %v158 = vmul.f32 %v150, %v156
    %v159 = vlaneseq
    %v160 = vand.u32 %v159, 127
    %vm161 = vcmp.lt.s32.totalorder %v160, 32
    %v162 = vsel %vm161, %v157, 0.0
    %v163 = vsel %vm161, %v158, 0.0
    %164 = vadd.xlane.f32.xlu0 %v162
    %v165 = vpop.xlane.xlu0 %164
    %166 = vadd.xlane.f32.xlu0 %v163
    %v167 = vpop.xlane.xlu0 %166
    %v168 = vmul.f32 %v165, 0.03125
    %v169 = vmul.f32 %v167, 0.03125
    %v170 = vsub.f32 %v162, %v168
    %v171 = vsub.f32 %v163, %v169
    %v172 = vsel %vm161, %v170, 0.0
    %v173 = vsel %vm161, %v171, 0.0
    %v174 = vmul.f32 %v172, %v172
    %v175 = vmul.f32 %v173, %v173
    %176 = vadd.xlane.f32.xlu0 %v174
    %v177 = vpop.xlane.xlu0 %176
    %178 = vadd.xlane.f32.xlu0 %v175
    %v179 = vpop.xlane.xlu0 %178
    %v180 = vmul.f32 %v177, 0.03125
    %v181 = vmul.f32 %v179, 0.03125
    %v182 = vadd.f32 %v180, 1e-12
    %v183 = vadd.f32 %v181, 1e-12
    %v184 = vrsqrt.pop %v182
    %v185 = vrsqrt.pop %v183
    %v186 = vmul.f32 %v172, %v184
    %v187 = vmul.f32 %v173, %v185
    %v188 = vld [vmem:[%s3] sm:$0x1]
    %v190 = vlaneseq
    %v191 = vshrl.u32 %v190, 7
    %v192 = vsub.s32 0, %v191
    %v193 = vrot.slane %v188, %v192
    %v195 = vmul.f32 %v186, %v193
    %v196 = vmul.f32 %v187, %v193
    %v197 = vld [vmem:[%s4] sm:$0x1]
    %v199 = vlaneseq
    %v200 = vshrl.u32 %v199, 7
    %v201 = vsub.s32 0, %v200
    %v202 = vrot.slane %v197, %v201
    %v204 = vadd.f32 %v195, %v202
    %v205 = vadd.f32 %v196, %v202
    %206 = vst [vmem:[#allocation7] sm:$0xff] %v204
    %207 = vst [vmem:[#allocation7 + $0x8] sm:$0xff] %v205
    // Predicated region
    $region30: #{tpu_custom_call.1} parent=1 // pred_check
      _
    $region31: #{tpu_custom_call.1} parent=1 // pred_check_branch
      %209 = sbr.rel (0) target = $region33
    $region32: #{tpu_custom_call.1} parent=1 // pred_region
      %s211 = ssub.s32 256, 256
      %212 = vsyncadd [#allocation4], %s211
      %s213 = sshll.u32 [#allocation7], 4
      %s214 = int_to_ptr.vmem [resolvable:$true] %s213
      %219 = dma.vmem_to_hbm [thread:$0]  %s214, 256, %s5, [#allocation4], 128, 128, 8
    $region33: #{tpu_custom_call.1} parent=1 // pred_fallthru
      _
    // Predicated region
    $region34: #{tpu_custom_call.1} parent=1 // pred_check
      _
    $region35: #{tpu_custom_call.1} parent=1 // pred_check_branch
      %221 = sbr.rel (0) target = $region37
    $region36: #{tpu_custom_call.1} parent=1 // pred_region
      %222 = dma.done [#allocation4], 256
    $region37: #{tpu_custom_call.1} parent=1 // pred_fallthru
      _
    %223 = vsyncpa [#allocation3], 1
    %224 = vsyncpa [#allocation6], 1
    %225 = vsyncpa [#allocation4], 1

</llo_original>
